<compile_context>
chip_gen: v7x
topology: tpu7x:2x2x1
jax: 0.10.0
libtpu: 0.0.40
codegen_flags: <defaults>
</compile_context>

<pallas_src>
import functools
import math

import jax
import jax.numpy as jnp
from jax import lax
from jax.experimental import pallas as pl
from jax.experimental.pallas import tpu as pltpu


def _round_up(x: int, m: int) -> int:
    return ((x + m - 1) // m) * m


def _largest_tile(dim_p: int, cap: int) -> int:
    """Largest multiple-of-128 divisor of dim_p that is <= cap (dim_p itself if it fits)."""
    cap = min(cap, dim_p)
    if dim_p <= cap:
        return dim_p
    c = (cap // 128) * 128
    while c > 128 and dim_p % c:
        c -= 128
    return max(c, 128)


def _vmem_bytes(tm: int, tn: int, tk: int, out_itemsize: int) -> int:
    """Rough double-buffered VMEM footprint of one grid step."""
    buf = 2                                    # BlockSpec double-buffering
    x_b = buf * tm * tk * 2                    # x tile (bf16)
    w_b = buf * 2 * tn * tk * 2                # weight_mu + weight_sigma tiles (bf16)
    vec = buf * (tk + 2 * tn) * 4              # eps_in / eps_out / b_eff rows (f32)
    o_b = buf * tm * tn * out_itemsize         # output tile
    acc = 2 * tm * tn * 4                      # two f32 accumulators (single-buffered scratch)
    return x_b + w_b + vec + o_b + acc


# Stays under v5e's 16 MiB default scoped-VMEM limit (and far under v6e/v7x's 32 MiB),
# so no vmem_limit_bytes override is needed on any generation.
_VMEM_BUDGET_BYTES = 12 * 1024 * 1024


def _noisy_linear_kernel(x_ref, wmu_ref, wsig_ref, eps_in_ref, eps_out_ref,
                         beff_ref, o_ref, acc_mu_ref, acc_sig_ref, *, compute_dtype):
    k = pl.program_id(2)

    @pl.when(k == 0)
    def _():
        acc_mu_ref[...] = jnp.zeros_like(acc_mu_ref)
        acc_sig_ref[...] = jnp.zeros_like(acc_sig_ref)

    x_t = x_ref[...]                                           # (tm, tk) bf16

    # mu partial: x @ W_mu^T — weights consumed in their stored (out, in) layout.
    acc_mu_ref[...] += lax.dot_general(
        x_t, wmu_ref[...],
        dimension_numbers=(((1,), (1,)), ((), ())),
        preferred_element_type=jnp.float32)                    # (tm, tn) f32

    # sigma partial: (x * eps_in) @ W_sigma^T ; eps_out applied once at the epilogue.
    # eps_in scaling in f32 on the VPU (v5e has no bf16 VALU), cast only for the MXU.
    x_s = (x_t.astype(jnp.float32) * eps_in_ref[...]).astype(compute_dtype)
    acc_sig_ref[...] += lax.dot_general(
        x_s, wsig_ref[...],
        dimension_numbers=(((1,), (1,)), ((), ())),
        preferred_element_type=jnp.float32)                    # (tm, tn) f32

    @pl.when(k == pl.num_programs(2) - 1)
    def _():
        o_ref[...] = (acc_mu_ref[...]
                      + acc_sig_ref[...] * eps_out_ref[...]
                      + beff_ref[...]).astype(o_ref.dtype)


def noisy_linear(x, weight_mu, weight_sigma, bias_mu, bias_sigma,
                 eps_in, eps_out, *, compute_dtype=jnp.bfloat16):
    """y = x @ (weight_mu + weight_sigma * outer(eps_out, eps_in)).T
           + (bias_mu + bias_sigma * eps_out)"""
    B, in_f = x.shape
    out_f, in_f2 = weight_mu.shape
    assert in_f2 == in_f

    out_dtype = x.dtype
    out_itemsize = jnp.dtype(out_dtype).itemsize

    # ---- lane/sublane-friendly padded extents and tile selection --------------
    in_p = _round_up(in_f, 128)
    out_p = _round_up(out_f, 128)

    # Batch tile: cap at 256 so weights are re-streamed at most every 256 rows;
    # round to the output dtype's native sublane tile (8 for f32, 16 for bf16).
    sub = 8 if out_itemsize >= 4 else 16
    if B >= 256:
        tm = 256
    elif B >= 128:
        tm = 128
    else:
        tm = _round_up(B, sub)
    B_p = _round_up(B, tm)

    # Start from the largest lane-aligned tiles (full extents for NoisyNet-sized
    # layers -> 1-2 grid steps), then shrink to stay inside the VMEM budget.
    tk = _largest_tile(in_p, 2048)
    tn = _largest_tile(out_p, 1024)
    # Keep >=2 blocks across the parallel axes so v7x's two TensorCores both get
    # work (costs one ~0.35us extra grid step on single-TC chips — negligible).
    if B_p // tm == 1 and out_p // tn == 1 and out_p >= 256:
        tn = _largest_tile(out_p, out_p // 2)
    while _vmem_bytes(tm, tn, tk, out_itemsize) > _VMEM_BUDGET_BYTES and tk > 128:
        tk = _largest_tile(in_p, tk - 128)
    while _vmem_bytes(tm, tn, tk, out_itemsize) > _VMEM_BUDGET_BYTES and tn > 128:
        tn = _largest_tile(out_p, tn - 128)

    # ---- host-side prep: bf16 streams, tiny f32 vectors ------------------------
    # TODO(synk): in a real model, pre-cast/pre-pad the weights once and cache them
    # across forward calls instead of re-materializing the padded bf16 copies here.
    f32 = jnp.float32
    x_p = jnp.pad(x.astype(compute_dtype), ((0, B_p - B), (0, in_p - in_f)))
    wmu_p = jnp.pad(weight_mu.astype(compute_dtype),
                    ((0, out_p - out_f), (0, in_p - in_f)))
    wsig_p = jnp.pad(weight_sigma.astype(compute_dtype),
                     ((0, out_p - out_f), (0, in_p - in_f)))
    eps_in_row = jnp.pad(eps_in.astype(f32), (0, in_p - in_f)).reshape(1, in_p)
    eps_out_row = jnp.pad(eps_out.astype(f32), (0, out_p - out_f)).reshape(1, out_p)
    # bias_epsilon == eps_out for factorized noise; b_eff is a tiny vector op -> XLA.
    b_eff = bias_mu.astype(f32) + bias_sigma.astype(f32) * eps_out.astype(f32)
    b_eff_row = jnp.pad(b_eff, (0, out_p - out_f)).reshape(1, out_p)

    grid = (B_p // tm, out_p // tn, in_p // tk)
    kernel = functools.partial(_noisy_linear_kernel, compute_dtype=compute_dtype)

    y_padded = pl.pallas_call(
        kernel,
        out_shape=jax.ShapeDtypeStruct((B_p, out_p), out_dtype),
        grid_spec=pltpu.PrefetchScalarGridSpec(
            num_scalar_prefetch=0,
            grid=grid,
            in_specs=[
                pl.BlockSpec((tm, tk), lambda i, j, k: (i, k)),   # x            (bf16)
                pl.BlockSpec((tn, tk), lambda i, j, k: (j, k)),   # weight_mu    (bf16)
                pl.BlockSpec((tn, tk), lambda i, j, k: (j, k)),   # weight_sigma (bf16)
                pl.BlockSpec((1, tk), lambda i, j, k: (0, k)),    # eps_in row   (f32)
                pl.BlockSpec((1, tn), lambda i, j, k: (0, j)),    # eps_out row  (f32)
                pl.BlockSpec((1, tn), lambda i, j, k: (0, j)),    # b_eff row    (f32)
            ],
            out_specs=pl.BlockSpec((tm, tn), lambda i, j, k: (i, j)),
            scratch_shapes=[pltpu.VMEM((tm, tn), jnp.float32),    # mu accumulator
                            pltpu.VMEM((tm, tn), jnp.float32)],   # sigma accumulator
        ),
        compiler_params=pltpu.CompilerParams(
            dimension_semantics=("parallel", "parallel", "arbitrary")),
    )(x_p, wmu_p, wsig_p, eps_in_row, eps_out_row, b_eff_row)

    return y_padded[:B, :out_f]


def scale_noise(key, size):
    """Factorized gaussian noise: sign(x) * sqrt(|x|)."""
    x = jax.random.normal(key, (size,), dtype=jnp.float32)
    return jnp.sign(x) * jnp.sqrt(jnp.abs(x))


def init_noisy_linear_params(key, in_features, out_features, std_init=0.5):
    """Parameter + factorized-noise init, mirroring NoisyLinear.__init__/reset_noise."""
    k_wmu, k_bmu, k_ein, k_eout = jax.random.split(key, 4)
    mu_range = 1.0 / math.sqrt(in_features)

    weight_mu = jax.random.uniform(
        k_wmu, (out_features, in_features), jnp.float32, -mu_range, mu_range)
    weight_sigma = jnp.full((out_features, in_features),
                            std_init / math.sqrt(in_features), jnp.float32)
    bias_mu = jax.random.uniform(
        k_bmu, (out_features,), jnp.float32, -mu_range, mu_range)
    bias_sigma = jnp.full((out_features,),
                          std_init / math.sqrt(out_features), jnp.float32)

    eps_in = scale_noise(k_ein, in_features)      # (in,)
    eps_out = scale_noise(k_eout, out_features)   # (out,) ; bias_epsilon == eps_out

    return dict(weight_mu=weight_mu, weight_sigma=weight_sigma,
                bias_mu=bias_mu, bias_sigma=bias_sigma,
                eps_in=eps_in, eps_out=eps_out)


def _run_case(key, B, in_f, out_f):
    k_params, k_x = jax.random.split(key)
    p = init_noisy_linear_params(k_params, in_f, out_f, std_init=0.5)
    x = jax.random.normal(k_x, (B, in_f), dtype=jnp.float32)

    y = noisy_linear(x, p["weight_mu"], p["weight_sigma"],
                     p["bias_mu"], p["bias_sigma"], p["eps_in"], p["eps_out"])
    y = jax.block_until_ready(y)

    # Pure-JAX f32 reference of the module's forward (factorized noise).
    w_eff = p["weight_mu"] + p["weight_sigma"] * jnp.outer(p["eps_out"], p["eps_in"])
    b_eff = p["bias_mu"] + p["bias_sigma"] * p["eps_out"]
    y_ref = x @ w_eff.T + b_eff

    assert y.shape == y_ref.shape
    # bf16 MXU operands with f32 accumulation -> sub-percent relative error budget.
    assert jnp.allclose(y, y_ref, atol=3e-2, rtol=3e-2), \
        float(jnp.max(jnp.abs(y - y_ref)))


if __name__ == "__main__":
    key = jax.random.PRNGKey(0)
    k1, k2 = jax.random.split(key)

    # Small Rainbow-style layer: exercises the padding path (32 -> 128, 64 -> 128)
    # and the single-step (1,1,1) grid with full-extent tiles.
    _run_case(k1, B=8, in_f=32, out_f=64)
    # Non-aligned shapes: exercises padding (300 -> 384), the >=2-parallel-block
    # split on the N axis, and the K-contraction in a single 384-wide step.
    _run_case(k2, B=16, in_f=300, out_f=300)

    print("KERNEL_OK")
</pallas_src>

<mosaic_0001>
module attributes {stable_mosaic.version = 11 : i64} {
  func.func @_noisy_linear_kernel(%arg0: i32, %arg1: i32, %arg2: i32, %arg3: memref<8x128xbf16, #tpu.memory_space<vmem>>, %arg4: memref<128x128xbf16, #tpu.memory_space<vmem>>, %arg5: memref<128x128xbf16, #tpu.memory_space<vmem>>, %arg6: memref<1x128xf32, #tpu.memory_space<vmem>>, %arg7: memref<1x128xf32, #tpu.memory_space<vmem>>, %arg8: memref<1x128xf32, #tpu.memory_space<vmem>>, %arg9: memref<8x128xf32, #tpu.memory_space<vmem>>, %arg10: memref<8x128xf32, #tpu.memory_space<vmem>>, %arg11: memref<8x128xf32, #tpu.memory_space<vmem>>) attributes {dimension_semantics = [#tpu.dimension_semantics<parallel>, #tpu.dimension_semantics<parallel>, #tpu.dimension_semantics<arbitrary>], iteration_bounds = array<i64: 1, 1, 1>, scalar_prefetch = 0 : i64, scratch_operands = 2 : i64, tpu.core_type = #tpu.core_type<tc>, window_params = [{transform_indices = @transform_0, window_bounds = array<i64: 8, 128>}, {transform_indices = @transform_1, window_bounds = array<i64: 128, 128>}, {transform_indices = @transform_2, window_bounds = array<i64: 128, 128>}, {transform_indices = @transform_3, window_bounds = array<i64: 1, 128>}, {transform_indices = @transform_4, window_bounds = array<i64: 1, 128>}, {transform_indices = @transform_5, window_bounds = array<i64: 1, 128>}, {transform_indices = @transform_6, window_bounds = array<i64: 8, 128>}]} {
    %c0_i32 = arith.constant 0 : i32
    %0 = arith.cmpi eq, %arg2, %c0_i32 : i32
    %1 = arith.extui %0 : i1 to i32
    %c0_i32_0 = arith.constant 0 : i32
    %2 = arith.cmpi ne, %1, %c0_i32_0 : i32
    scf.if %2 {
      %cst_19 = arith.constant 0.000000e+00 : f32
      %22 = vector.broadcast %cst_19 : f32 to vector<8x128xf32>
      %c0_20 = arith.constant 0 : index
      %c0_21 = arith.constant 0 : index
      %23 = vector.load %arg10[%c0_20, %c0_21] : memref<8x128xf32, #tpu.memory_space<vmem>>, vector<8x128xf32>
      tpu.vector_store %arg10[%c0_20, %c0_21], %22 {strides = array<i32>} : memref<8x128xf32, #tpu.memory_space<vmem>>, vector<8x128xf32>,
      %cst_22 = arith.constant 0.000000e+00 : f32
      %24 = vector.broadcast %cst_22 : f32 to vector<8x128xf32>
      %c0_23 = arith.constant 0 : index
      %c0_24 = arith.constant 0 : index
      %25 = vector.load %arg11[%c0_23, %c0_24] : memref<8x128xf32, #tpu.memory_space<vmem>>, vector<8x128xf32>
      tpu.vector_store %arg11[%c0_23, %c0_24], %24 {strides = array<i32>} : memref<8x128xf32, #tpu.memory_space<vmem>>, vector<8x128xf32>,
    } else {
    }
    %c0 = arith.constant 0 : index
    %c0_1 = arith.constant 0 : index
    %3 = vector.load %arg3[%c0, %c0_1] : memref<8x128xbf16, #tpu.memory_space<vmem>>, vector<8x128xbf16>
    %c0_2 = arith.constant 0 : index
    %c0_3 = arith.constant 0 : index
    %4 = vector.load %arg10[%c0_2, %c0_3] : memref<8x128xf32, #tpu.memory_space<vmem>>, vector<8x128xf32>
    %c0_4 = arith.constant 0 : index
    %c0_5 = arith.constant 0 : index
    %5 = vector.load %arg4[%c0_4, %c0_5] : memref<128x128xbf16, #tpu.memory_space<vmem>>, vector<128x128xbf16>
    %cst = arith.constant dense<0.000000e+00> : vector<8x128xf32>
    %6 = tpu.matmul %3, %5, %cst {dimension_numbers = #tpu.dot_dimension_numbers<[1], [1], [0], [0], [0, 0, 1, 0], [], []>} : vector<8x128xbf16>, vector<128x128xbf16>, vector<8x128xf32> -> vector<8x128xf32>
    %7 = arith.addf %4, %6 : vector<8x128xf32>
    %c0_6 = arith.constant 0 : index
    %c0_7 = arith.constant 0 : index
    %8 = vector.load %arg10[%c0_6, %c0_7] : memref<8x128xf32, #tpu.memory_space<vmem>>, vector<8x128xf32>
    tpu.vector_store %arg10[%c0_6, %c0_7], %7 {strides = array<i32>} : memref<8x128xf32, #tpu.memory_space<vmem>>, vector<8x128xf32>,
    %9 = arith.extf %3 : vector<8x128xbf16> to vector<8x128xf32>
    %c0_8 = arith.constant 0 : index
    %c0_9 = arith.constant 0 : index
    %10 = vector.load %arg6[%c0_8, %c0_9] : memref<1x128xf32, #tpu.memory_space<vmem>>, vector<1x128xf32>
    %11 = vector.broadcast %10 : vector<1x128xf32> to vector<8x128xf32>
    %12 = arith.mulf %9, %11 : vector<8x128xf32>
    %13 = arith.truncf %12 : vector<8x128xf32> to vector<8x128xbf16>
    %c0_10 = arith.constant 0 : index
    %c0_11 = arith.constant 0 : index
    %14 = vector.load %arg11[%c0_10, %c0_11] : memref<8x128xf32, #tpu.memory_space<vmem>>, vector<8x128xf32>
    %c0_12 = arith.constant 0 : index
    %c0_13 = arith.constant 0 : index
    %15 = vector.load %arg5[%c0_12, %c0_13] : memref<128x128xbf16, #tpu.memory_space<vmem>>, vector<128x128xbf16>
    %cst_14 = arith.constant dense<0.000000e+00> : vector<8x128xf32>
    %16 = tpu.matmul %13, %15, %cst_14 {dimension_numbers = #tpu.dot_dimension_numbers<[1], [1], [0], [0], [0, 0, 1, 0], [], []>} : vector<8x128xbf16>, vector<128x128xbf16>, vector<8x128xf32> -> vector<8x128xf32>
    %17 = arith.addf %14, %16 : vector<8x128xf32>
    %c0_15 = arith.constant 0 : index
    %c0_16 = arith.constant 0 : index
    %18 = vector.load %arg11[%c0_15, %c0_16] : memref<8x128xf32, #tpu.memory_space<vmem>>, vector<8x128xf32>
    tpu.vector_store %arg11[%c0_15, %c0_16], %17 {strides = array<i32>} : memref<8x128xf32, #tpu.memory_space<vmem>>, vector<8x128xf32>,
    %c0_i32_17 = arith.constant 0 : i32
    %19 = arith.cmpi eq, %arg2, %c0_i32_17 : i32
    %20 = arith.extui %19 : i1 to i32
    %c0_i32_18 = arith.constant 0 : i32
    %21 = arith.cmpi ne, %20, %c0_i32_18 : i32
    scf.if %21 {
      %c0_19 = arith.constant 0 : index
      %c0_20 = arith.constant 0 : index
      %22 = vector.load %arg10[%c0_19, %c0_20] : memref<8x128xf32, #tpu.memory_space<vmem>>, vector<8x128xf32>
      %c0_21 = arith.constant 0 : index
      %c0_22 = arith.constant 0 : index
      %23 = vector.load %arg11[%c0_21, %c0_22] : memref<8x128xf32, #tpu.memory_space<vmem>>, vector<8x128xf32>
      %c0_23 = arith.constant 0 : index
      %c0_24 = arith.constant 0 : index
      %24 = vector.load %arg7[%c0_23, %c0_24] : memref<1x128xf32, #tpu.memory_space<vmem>>, vector<1x128xf32>
      %25 = vector.broadcast %24 : vector<1x128xf32> to vector<8x128xf32>
      %26 = arith.mulf %23, %25 : vector<8x128xf32>
      %27 = arith.addf %22, %26 : vector<8x128xf32>
      %c0_25 = arith.constant 0 : index
      %c0_26 = arith.constant 0 : index
      %28 = vector.load %arg8[%c0_25, %c0_26] : memref<1x128xf32, #tpu.memory_space<vmem>>, vector<1x128xf32>
      %29 = vector.broadcast %28 : vector<1x128xf32> to vector<8x128xf32>
      %30 = arith.addf %27, %29 : vector<8x128xf32>
      %c0_27 = arith.constant 0 : index
      %c0_28 = arith.constant 0 : index
      %31 = vector.load %arg9[%c0_27, %c0_28] : memref<8x128xf32, #tpu.memory_space<vmem>>, vector<8x128xf32>
      tpu.vector_store %arg9[%c0_27, %c0_28], %30 {strides = array<i32>} : memref<8x128xf32, #tpu.memory_space<vmem>>, vector<8x128xf32>,
    } else {
    }
    return
  }
  func.func @transform_0(%arg0: i32, %arg1: i32, %arg2: i32) -> (i32, i32) {
    %c0_i32 = arith.constant 0 : i32
    return %arg0, %arg2 : i32, i32
  }
  func.func @transform_1(%arg0: i32, %arg1: i32, %arg2: i32) -> (i32, i32) {
    %c0_i32 = arith.constant 0 : i32
    return %arg1, %arg2 : i32, i32
  }
  func.func @transform_2(%arg0: i32, %arg1: i32, %arg2: i32) -> (i32, i32) {
    %c0_i32 = arith.constant 0 : i32
    return %arg1, %arg2 : i32, i32
  }
  func.func @transform_3(%arg0: i32, %arg1: i32, %arg2: i32) -> (i32, i32) {
    %c0_i32 = arith.constant 0 : i32
    %c0_i32_0 = arith.constant 0 : i32
    return %c0_i32, %arg2 : i32, i32
  }
  func.func @transform_4(%arg0: i32, %arg1: i32, %arg2: i32) -> (i32, i32) {
    %c0_i32 = arith.constant 0 : i32
    %c0_i32_0 = arith.constant 0 : i32
    return %c0_i32, %arg1 : i32, i32
  }
  func.func @transform_5(%arg0: i32, %arg1: i32, %arg2: i32) -> (i32, i32) {
    %c0_i32 = arith.constant 0 : i32
    %c0_i32_0 = arith.constant 0 : i32
    return %c0_i32, %arg1 : i32, i32
  }
  func.func @transform_6(%arg0: i32, %arg1: i32, %arg2: i32) -> (i32, i32) {
    %c0_i32 = arith.constant 0 : i32
    return %arg0, %arg1 : i32, i32
  }
}

</mosaic_0001>

<llo_original>
// kernel: tpu_custom_call.1
$region0: #{tpu_custom_call.1}
  #allocation0 [shape = 'u32[]', space=smem, size = 0x4, offset = 0x4, fixed_abs, tag = 'smem constant byte address 0x4 - core index']
  #allocation1 [shape = 'u32[144,128]{1,0:T(1,128)}', space=vmem, size = 0x12000, scoped, tag = 'internal scratch']
  #allocation2 [shape = 'f32[8,128]{1,0:T(8,128)}', space=vmem, size = 0x1000, scoped, tag = 'scratch operand']
  #allocation3 [shape = 'f32[8,128]{1,0:T(8,128)}', space=vmem, size = 0x1000, scoped, tag = 'scratch operand']
  %s0 = inlined_call_operand.hbm [shape: bf16[8,128], index: 0, kind: input, shape index: {}]
  %s1 = inlined_call_operand.hbm [shape: bf16[128,128], index: 1, kind: input, shape index: {}]
  %s2 = inlined_call_operand.hbm [shape: bf16[128,128], index: 2, kind: input, shape index: {}]
  %s3 = inlined_call_operand.vmem [shape: f32[1,128], index: 3, kind: input, shape index: {}]
  %s4 = inlined_call_operand.vmem [shape: f32[1,128], index: 4, kind: input, shape index: {}]
  %s5 = inlined_call_operand.vmem [shape: f32[1,128], index: 5, kind: input, shape index: {}]
  %s6 = inlined_call_operand.hbm [shape: f32[8,128], index: 6, kind: output, shape index: {}]
  %s7 = sld [smem:[#allocation0]]
  $region54: #{tpu_custom_call.1} parent=0
    _
  %s9 = ssub.s32 1, %s7
  %s10 = scalar_select 0, %s9, %s7
  $region1: #{tpu_custom_call.1} parent=0
    #allocation4 [shape = 'u8[2048]{0}', space=vmem, size = 0x800, scoped, tag = 'input window, operand 0, single buffered']
    #allocation5 [shape = 's32[1]{0}', space=sflag, size = 0x4, scoped, tag = 'scoped memory for tpu_custom_call.1']
    #allocation6 [shape = 's32[1]{0}', space=sflag, size = 0x4, scoped, tag = 'scoped memory for tpu_custom_call.1']
    #allocation7 [shape = 'u8[32768]{0}', space=vmem, size = 0x8000, scoped, tag = 'input window, operand 1, single buffered']
    #allocation8 [shape = 's32[1]{0}', space=sflag, size = 0x4, scoped, tag = 'scoped memory for tpu_custom_call.1']
    #allocation9 [shape = 'u8[32768]{0}', space=vmem, size = 0x8000, scoped, tag = 'input window, operand 2, single buffered']
    #allocation10 [shape = 'u8[4096]{0}', space=vmem, size = 0x1000, scoped, tag = 'output window, operand 0, single buffered']
    %11 = vsyncpa [#allocation5], 0
    %12 = vsyncpa [#allocation8], 0
    %13 = vsyncpa [#allocation6], 0
    // Predicated region
    $region2: #{tpu_custom_call.1} parent=1 // pred_check
      _
    $region3: #{tpu_custom_call.1} parent=1 // pred_check_branch
      %15 = sbr.rel (0) target = $region5
    $region4: #{tpu_custom_call.1} parent=1 // pred_region
      %s17 = ssub.s32 64, 64
      %18 = vsyncadd [#allocation5], %s17
      %s20 = sshll.u32 [#allocation4], 4
      %s21 = int_to_ptr.vmem [resolvable:$true] %s20
      %23 = dma.hbm_to_vmem [thread:$0]  %s0, 64, %s21, [#allocation5]
    $region5: #{tpu_custom_call.1} parent=1 // pred_fallthru
      _
    // Predicated region
    $region6: #{tpu_custom_call.1} parent=1 // pred_check
      _
    $region7: #{tpu_custom_call.1} parent=1 // pred_check_branch
      %25 = sbr.rel (0) target = $region9
    $region8: #{tpu_custom_call.1} parent=1 // pred_region
      %s27 = ssub.s32 1024, 1024
      %28 = vsyncadd [#allocation8], %s27
      %s29 = sshll.u32 [#allocation7], 4
      %s30 = int_to_ptr.vmem [resolvable:$true] %s29
      %35 = dma.hbm_to_vmem [thread:$0]  %s1, 1024, %s30, [#allocation8], 64, 64, 4
    $region9: #{tpu_custom_call.1} parent=1 // pred_fallthru
      _
    // Predicated region
    $region10: #{tpu_custom_call.1} parent=1 // pred_check
      _
    $region11: #{tpu_custom_call.1} parent=1 // pred_check_branch
      %37 = sbr.rel (0) target = $region13
    $region12: #{tpu_custom_call.1} parent=1 // pred_region
      %s39 = ssub.s32 1024, 1024
      %40 = vsyncadd [#allocation8], %s39
      %s41 = sshll.u32 [#allocation9], 4
      %s42 = int_to_ptr.vmem [resolvable:$true] %s41
      %47 = dma.hbm_to_vmem [thread:$0]  %s2, 1024, %s42, [#allocation8], 64, 64, 4
    $region13: #{tpu_custom_call.1} parent=1 // pred_fallthru
      _
    // Predicated region
    $region14: #{tpu_custom_call.1} parent=1 // pred_check
      _
    $region15: #{tpu_custom_call.1} parent=1 // pred_check_branch
      %49 = sbr.rel (0) target = $region17
    $region16: #{tpu_custom_call.1} parent=1 // pred_region
      _
    $region17: #{tpu_custom_call.1} parent=1 // pred_fallthru
      _
    // Predicated region
    $region18: #{tpu_custom_call.1} parent=1 // pred_check
      _
    $region19: #{tpu_custom_call.1} parent=1 // pred_check_branch
      %51 = sbr.rel (0) target = $region21
    $region20: #{tpu_custom_call.1} parent=1 // pred_region
      _
    $region21: #{tpu_custom_call.1} parent=1 // pred_fallthru
      _
    // Predicated region
    $region22: #{tpu_custom_call.1} parent=1 // pred_check
      _
    $region23: #{tpu_custom_call.1} parent=1 // pred_check_branch
      %53 = sbr.rel (0) target = $region25
    $region24: #{tpu_custom_call.1} parent=1 // pred_region
      _
    $region25: #{tpu_custom_call.1} parent=1 // pred_fallthru
      _
    // Predicated region
    $region26: #{tpu_custom_call.1} parent=1 // pred_check
      _
    $region27: #{tpu_custom_call.1} parent=1 // pred_check_branch
      %55 = sbr.rel (0) target = $region29
    $region28: #{tpu_custom_call.1} parent=1 // pred_region
      %56 = dma.done [#allocation5], 64
    $region29: #{tpu_custom_call.1} parent=1 // pred_fallthru
      _
    // Predicated region
    $region30: #{tpu_custom_call.1} parent=1 // pred_check
      _
    $region31: #{tpu_custom_call.1} parent=1 // pred_check_branch
      %58 = sbr.rel (0) target = $region33
    $region32: #{tpu_custom_call.1} parent=1 // pred_region
      %59 = dma.done [#allocation8], 1024
    $region33: #{tpu_custom_call.1} parent=1 // pred_fallthru
      _
    // Predicated region
    $region34: #{tpu_custom_call.1} parent=1 // pred_check
      _
    $region35: #{tpu_custom_call.1} parent=1 // pred_check_branch
      %61 = sbr.rel (0) target = $region37
    $region36: #{tpu_custom_call.1} parent=1 // pred_region
      %62 = dma.done [#allocation8], 1024
    $region37: #{tpu_custom_call.1} parent=1 // pred_fallthru
      _
    %p64 = scmp.eq.s32.totalorder 0, 0
    // Predicated region
    $region38: #{tpu_custom_call.1} parent=1 // pred_check
      %p65 = pneg %p64
    $region39: #{tpu_custom_call.1} parent=1 // pred_check_branch
      %67 = sbr.rel (%p65) target = $region41
    $region40: #{tpu_custom_call.1} parent=1 // pred_region
      %68 = vst [vmem:[#allocation2] sm:$0xff] 0.0
      %69 = vst [vmem:[#allocation3] sm:$0xff] 0.0
    $region41: #{tpu_custom_call.1} parent=1 // pred_fallthru
      _
    %v70 = vld [vmem:[#allocation4] sm:$0xf]
    %v71 = vld [vmem:[#allocation2] sm:$0xff]
    %v72 = vld [vmem:[#allocation7] sm:$0xf]
    %v73 = vld [vmem:[#allocation7 + $0x4] sm:$0xf]
    %v74 = vld [vmem:[#allocation7 + $0x8] sm:$0xf]
    %v75 = vld [vmem:[#allocation7 + $0xc] sm:$0xf]
    %v76 = vld [vmem:[#allocation7 + $0x10] sm:$0xf]
    %v77 = vld [vmem:[#allocation7 + $0x14] sm:$0xf]
    %v78 = vld [vmem:[#allocation7 + $0x18] sm:$0xf]
    %v79 = vld [vmem:[#allocation7 + $0x1c] sm:$0xf]
    %v80 = vld [vmem:[#allocation7 + $0x20] sm:$0xf]
    %v81 = vld [vmem:[#allocation7 + $0x24] sm:$0xf]
    %v82 = vld [vmem:[#allocation7 + $0x28] sm:$0xf]
    %v83 = vld [vmem:[#allocation7 + $0x2c] sm:$0xf]
    %v84 = vld [vmem:[#allocation7 + $0x30] sm:$0xf]
    %v85 = vld [vmem:[#allocation7 + $0x34] sm:$0xf]
    %v86 = vld [vmem:[#allocation7 + $0x38] sm:$0xf]
    %v87 = vld [vmem:[#allocation7 + $0x3c] sm:$0xf]
    %v104 = vunpack.c.l.b16 %v72
    %v105 = vunpack.c.l.b16 %v73
    %v106 = vunpack.c.l.b16 %v74
    %v107 = vunpack.c.l.b16 %v75
    %v108 = vunpack.c.l.b16 %v76
    %v109 = vunpack.c.l.b16 %v77
    %v110 = vunpack.c.l.b16 %v78
    %v111 = vunpack.c.l.b16 %v79
    %v112 = vunpack.c.l.b16 %v80
    %v113 = vunpack.c.l.b16 %v81
    %v114 = vunpack.c.l.b16 %v82
    %v115 = vunpack.c.l.b16 %v83
    %v116 = vunpack.c.l.b16 %v84
    %v117 = vunpack.c.l.b16 %v85
    %v118 = vunpack.c.l.b16 %v86
    %v119 = vunpack.c.l.b16 %v87
    %v120 = vpack.c.b16 %v105, %v104
    %v121 = vpack.c.b16 %v107, %v106
    %v122 = vpack.c.b16 %v109, %v108
    %v123 = vpack.c.b16 %v111, %v110
    %v124 = vpack.c.b16 %v113, %v112
    %v125 = vpack.c.b16 %v115, %v114
    %v126 = vpack.c.b16 %v117, %v116
    %v127 = vpack.c.b16 %v119, %v118
    %136 = vmatprep.subr.bf16.mxu0 0
    %137 = vmatpush1.bf16.xpose.msra.mxu0 %v120
    %138 = vmatprep.subr.bf16.mxu0 0
    %139 = vmatpush1.bf16.xpose.msra.mxu0 %v121
    %140 = vmatprep.subr.bf16.mxu0 0
    %141 = vmatpush1.bf16.xpose.msra.mxu0 %v122
    %142 = vmatprep.subr.bf16.mxu0 0
    %143 = vmatpush1.bf16.xpose.msra.mxu0 %v123
    %144 = vmatprep.subr.bf16.mxu0 0
    %145 = vmatpush1.bf16.xpose.msra.mxu0 %v124
    %146 = vmatprep.subr.bf16.mxu0 0
    %147 = vmatpush1.bf16.xpose.msra.mxu0 %v125
    %148 = vmatprep.subr.bf16.mxu0 0
    %149 = vmatpush1.bf16.xpose.msra.mxu0 %v126
    %150 = vmatprep.subr.bf16.mxu0 0
    %151 = vmatpush1.bf16.xpose.msra.mxu0 %v127
    %152 = vmatprep.subr.bf16.mxu0 0
    %153 = vmatpush1.bf16.xpose.msra.mxu0 0
    %154 = vmatprep.subr.bf16.mxu0 0
    %155 = vmatpush1.bf16.xpose.msra.mxu0 0
    %156 = vmatprep.subr.bf16.mxu0 0
    %157 = vmatpush1.bf16.xpose.msra.mxu0 0
    %158 = vmatprep.subr.bf16.mxu0 0
    %159 = vmatpush1.bf16.xpose.msra.mxu0 0
    %160 = vmatprep.subr.bf16.mxu0 0
    %161 = vmatpush1.bf16.xpose.msra.mxu0 0
    %162 = vmatprep.subr.bf16.mxu0 0
    %163 = vmatpush1.bf16.xpose.msra.mxu0 0
    %164 = vmatprep.subr.bf16.mxu0 0
    %165 = vmatpush1.bf16.xpose.msra.mxu0 0
    %166 = vmatprep.subr.bf16.mxu0 0
    %167 = vmatpush1.bf16.xpose.msra.mxu0 0
    %168 = vmatprep.mubr.bf16.mxu0 0
    %169 = vmatmul.mubr.bf16.gmra.mrb[0].mxu0 %v70
    %v170 = vpop.f32.mrb[0].mxu0
    %v171 = vadd.f32 0.0, %v170
    %v172 = vpop.f32.mrb[0].mxu0
    %v173 = vpop.f32.mrb[0].mxu0
    %v174 = vpop.f32.mrb[0].mxu0
    %175 = vdwg.mxu0
    %v176 = vadd.f32 %v71, %v171
    %177 = vst [vmem:[#allocation2] sm:$0xff] %v176
    %v178 = vunpack.c.l.bf16 %v70
    %v179 = vld [vmem:[%s3] sm:$0x1]
    %v181 = vlaneseq
    %v182 = vshrl.u32 %v181, 7
    %v183 = vsub.s32 0, %v182
    %v184 = vrot.slane %v179, %v183
    %v186 = vmul.f32 %v178, %v184
    %v187 = vpack.c.bf16 %v186, %v186
    %v188 = vld [vmem:[#allocation3] sm:$0xff]
    %v189 = vld [vmem:[#allocation9] sm:$0xf]
    %v190 = vld [vmem:[#allocation9 + $0x4] sm:$0xf]
    %v191 = vld [vmem:[#allocation9 + $0x8] sm:$0xf]
    %v192 = vld [vmem:[#allocation9 + $0xc] sm:$0xf]
    %v193 = vld [vmem:[#allocation9 + $0x10] sm:$0xf]
    %v194 = vld [vmem:[#allocation9 + $0x14] sm:$0xf]
    %v195 = vld [vmem:[#allocation9 + $0x18] sm:$0xf]
    %v196 = vld [vmem:[#allocation9 + $0x1c] sm:$0xf]
    %v197 = vld [vmem:[#allocation9 + $0x20] sm:$0xf]
    %v198 = vld [vmem:[#allocation9 + $0x24] sm:$0xf]
    %v199 = vld [vmem:[#allocation9 + $0x28] sm:$0xf]
    %v200 = vld [vmem:[#allocation9 + $0x2c] sm:$0xf]
    %v201 = vld [vmem:[#allocation9 + $0x30] sm:$0xf]
    %v202 = vld [vmem:[#allocation9 + $0x34] sm:$0xf]
    %v203 = vld [vmem:[#allocation9 + $0x38] sm:$0xf]
    %v204 = vld [vmem:[#allocation9 + $0x3c] sm:$0xf]
    %v221 = vunpack.c.l.b16 %v189
    %v222 = vunpack.c.l.b16 %v190
    %v223 = vunpack.c.l.b16 %v191
    %v224 = vunpack.c.l.b16 %v192
    %v225 = vunpack.c.l.b16 %v193
    %v226 = vunpack.c.l.b16 %v194
    %v227 = vunpack.c.l.b16 %v195
    %v228 = vunpack.c.l.b16 %v196
    %v229 = vunpack.c.l.b16 %v197
    %v230 = vunpack.c.l.b16 %v198
    %v231 = vunpack.c.l.b16 %v199
    %v232 = vunpack.c.l.b16 %v200
    %v233 = vunpack.c.l.b16 %v201
    %v234 = vunpack.c.l.b16 %v202
    %v235 = vunpack.c.l.b16 %v203
    %v236 = vunpack.c.l.b16 %v204
    %v237 = vpack.c.b16 %v222, %v221
    %v238 = vpack.c.b16 %v224, %v223
    %v239 = vpack.c.b16 %v226, %v225
    %v240 = vpack.c.b16 %v228, %v227
    %v241 = vpack.c.b16 %v230, %v229
    %v242 = vpack.c.b16 %v232, %v231
    %v243 = vpack.c.b16 %v234, %v233
    %v244 = vpack.c.b16 %v236, %v235
    %253 = vmatprep.subr.bf16.mxu0 0
    %254 = vmatpush1.bf16.xpose.msra.mxu0 %v237
    %255 = vmatprep.subr.bf16.mxu0 0
    %256 = vmatpush1.bf16.xpose.msra.mxu0 %v238
    %257 = vmatprep.subr.bf16.mxu0 0
    %258 = vmatpush1.bf16.xpose.msra.mxu0 %v239
    %259 = vmatprep.subr.bf16.mxu0 0
    %260 = vmatpush1.bf16.xpose.msra.mxu0 %v240
    %261 = vmatprep.subr.bf16.mxu0 0
    %262 = vmatpush1.bf16.xpose.msra.mxu0 %v241
    %263 = vmatprep.subr.bf16.mxu0 0
    %264 = vmatpush1.bf16.xpose.msra.mxu0 %v242
    %265 = vmatprep.subr.bf16.mxu0 0
    %266 = vmatpush1.bf16.xpose.msra.mxu0 %v243
    %267 = vmatprep.subr.bf16.mxu0 0
    %268 = vmatpush1.bf16.xpose.msra.mxu0 %v244
    %269 = vmatprep.subr.bf16.mxu0 0
    %270 = vmatpush1.bf16.xpose.msra.mxu0 0
    %271 = vmatprep.subr.bf16.mxu0 0
    %272 = vmatpush1.bf16.xpose.msra.mxu0 0
    %273 = vmatprep.subr.bf16.mxu0 0
    %274 = vmatpush1.bf16.xpose.msra.mxu0 0
    %275 = vmatprep.subr.bf16.mxu0 0
    %276 = vmatpush1.bf16.xpose.msra.mxu0 0
    %277 = vmatprep.subr.bf16.mxu0 0
    %278 = vmatpush1.bf16.xpose.msra.mxu0 0
    %279 = vmatprep.subr.bf16.mxu0 0
    %280 = vmatpush1.bf16.xpose.msra.mxu0 0
    %281 = vmatprep.subr.bf16.mxu0 0
    %282 = vmatpush1.bf16.xpose.msra.mxu0 0
    %283 = vmatprep.subr.bf16.mxu0 0
    %284 = vmatpush1.bf16.xpose.msra.mxu0 0
    %285 = vmatprep.mubr.bf16.mxu0 0
    %286 = vmatmul.mubr.bf16.gmra.mrb[0].mxu0 %v187
    %v287 = vpop.f32.mrb[0].mxu0
    %v288 = vadd.f32 0.0, %v287
    %v289 = vpop.f32.mrb[0].mxu0
    %v290 = vpop.f32.mrb[0].mxu0
    %v291 = vpop.f32.mrb[0].mxu0
    %292 = vdwg.mxu0
    %v293 = vadd.f32 %v188, %v288
    %294 = vst [vmem:[#allocation3] sm:$0xff] %v293
    // Predicated region
    $region42: #{tpu_custom_call.1} parent=1 // pred_check
      %p295 = pneg %p64
    $region43: #{tpu_custom_call.1} parent=1 // pred_check_branch
      %297 = sbr.rel (%p295) target = $region45
    $region44: #{tpu_custom_call.1} parent=1 // pred_region
      %v298 = vld [vmem:[#allocation2] sm:$0xff]
      %v299 = vld [vmem:[#allocation3] sm:$0xff]
      %v300 = vld [vmem:[%s4] sm:$0x1]
      %v302 = vlaneseq
      %v303 = vshrl.u32 %v302, 7
      %v304 = vsub.s32 0, %v303
      %v305 = vrot.slane %v300, %v304
      %v307 = vmul.f32 %v299, %v305
      %v308 = vadd.f32 %v298, %v307
      %v309 = vld [vmem:[%s5] sm:$0x1]
      %v311 = vlaneseq
      %v312 = vshrl.u32 %v311, 7
      %v313 = vsub.s32 0, %v312
      %v314 = vrot.slane %v309, %v313
      %v316 = vadd.f32 %v308, %v314
      %317 = vst [vmem:[#allocation10] sm:$0xff] %v316
    $region45: #{tpu_custom_call.1} parent=1 // pred_fallthru
      _
    // Predicated region
    $region46: #{tpu_custom_call.1} parent=1 // pred_check
      _
    $region47: #{tpu_custom_call.1} parent=1 // pred_check_branch
      %319 = sbr.rel (0) target = $region49
    $region48: #{tpu_custom_call.1} parent=1 // pred_region
      %s321 = ssub.s32 128, 128
      %322 = vsyncadd [#allocation6], %s321
      %s324 = sshll.u32 [#allocation10], 4
      %s325 = int_to_ptr.vmem [resolvable:$true] %s324
      %327 = dma.vmem_to_hbm [thread:$0]  %s325, 128, %s6, [#allocation6]
    $region49: #{tpu_custom_call.1} parent=1 // pred_fallthru
      _
    // Predicated region
    $region50: #{tpu_custom_call.1} parent=1 // pred_check
      _
    $region51: #{tpu_custom_call.1} parent=1 // pred_check_branch
      %329 = sbr.rel (0) target = $region53
    $region52: #{tpu_custom_call.1} parent=1 // pred_region
      %330 = dma.done [#allocation6], 128
    $region53: #{tpu_custom_call.1} parent=1 // pred_fallthru
      _
    %331 = vsyncpa [#allocation5], 1
    %332 = vsyncpa [#allocation8], 1
    %333 = vsyncpa [#allocation6], 1

</llo_original>
